<compile_context>
chip_gen: v5e
topology: v5e:2x2
jax: 0.10.0
libtpu: 0.0.40
codegen_flags: <defaults>
</compile_context>

<pallas_src>
import functools

import jax
import jax.numpy as jnp
from jax import lax
from jax.experimental import pallas as pl
from jax.experimental.pallas import tpu as pltpu


def _patch_merging_kernel(x_ref, g_ref, b_ref, wt_ref, wb_ref, o_ref, *, eps, c4):
    """Fused LayerNorm(4C) + Linear(4C->2C) on one (TR, 2, W2, 2C) input block.

    x_ref  : (TR, 2, W2, 2C)  natural-layout rows; axis1 = spatial-row parity,
                              last axis = [even-col C | odd-col C] channels.
    g_ref  : (2, 2C)          LN gamma, permuted: row0 -> [x0|x2], row1 -> [x1|x3]
    b_ref  : (2, 2C)          LN beta, same permutation
    wt_ref : (2C, 2C_out)     reduction-weight rows for the [x0|x2] channels
    wb_ref : (2C, 2C_out)     reduction-weight rows for the [x1|x3] channels
    o_ref  : (TR*W2, 2C_out)
    """
    tr, _, w2, c2 = x_ref.shape
    rows = tr * w2

    x = x_ref[...].astype(jnp.float32)                      # (TR, 2, W2, 2C)
    # Split row parity and merge (TR, W2) into the output-token row axis.
    # For W2 % 8 == 0 this reshape is layout-free; otherwise Mosaic inserts a
    # VMEM relayout (still zero extra HBM traffic).
    xt = x[:, 0].reshape(rows, c2)                          # [x0 | x2] per token
    xb = x[:, 1].reshape(rows, c2)                          # [x1 | x3] per token

    # Single-pass LN statistics over the full 4C group (split across the halves).
    inv_c4 = 1.0 / c4
    mean = (xt + xb).sum(axis=-1, keepdims=True) * inv_c4
    ex2 = (xt * xt + xb * xb).sum(axis=-1, keepdims=True) * inv_c4
    var = ex2 - mean * mean
    inv = lax.rsqrt(var + eps)                              # EUP slot

    g = g_ref[...].astype(jnp.float32)                      # (2, 2C)
    b = b_ref[...].astype(jnp.float32)
    yt = (xt - mean) * (inv * g[0]) + b[0]
    yb = (xb - mean) * (inv * g[1]) + b[1]

    # Two accumulating MXU matmuls == one (rows, 4C) x (4C, 2C_out) matmul.
    out = jnp.dot(yt.astype(wt_ref.dtype), wt_ref[...],
                  preferred_element_type=jnp.float32)
    out = out + jnp.dot(yb.astype(wb_ref.dtype), wb_ref[...],
                        preferred_element_type=jnp.float32)
    o_ref[...] = out.astype(o_ref.dtype)


def _choose_row_block(r2, w2, step_bytes_fn, *, target_rows, vmem_budget):
    """Pick TR (a divisor of r2): output block sublane-legal, working set within the
    VMEM budget, prefer >= 4 (else >= 2) grid steps, rows/step close to target."""
    divs = [d for d in range(1, r2 + 1) if r2 % d == 0]
    legal = [d for d in divs if (d * w2) % 8 == 0 or d == r2]
    if not legal:
        legal = [r2]
    feasible = [d for d in legal if step_bytes_fn(d) <= vmem_budget] or [legal[0]]

    def pick(cands):
        under = [d for d in cands if d * w2 <= target_rows]
        return max(under) if under else min(cands)

    for min_steps in (4, 2, 1):
        cands = [d for d in feasible if r2 // d >= min_steps]
        if cands:
            return pick(cands)
    return feasible[0]


def patch_merging(x, ln_gamma, ln_beta, w_reduction, H, W, *, eps=1e-5,
                  mxu_dtype=jnp.bfloat16, target_rows=1024,
                  vmem_budget_bytes=40 * 1024 * 1024):
    """Forward pass matching PatchMerging.forward(x, H, W).

    x           : (B, H*W, C)
    ln_gamma    : (4C,)      LayerNorm weight
    ln_beta     : (4C,)      LayerNorm bias
    w_reduction : (4C, 2C)   == PyTorch nn.Linear(4C, 2C, bias=False).weight.T
    mxu_dtype   : MXU operand dtype (f32 accumulation). bf16 halves weight DMA/VMEM
                  and runs at native MXU rate; pass jnp.float32 for the exact path.
    returns     : (B, ceil(H/2)*ceil(W/2), 2C)
    """
    B, L, C = x.shape
    assert L == H * W, "PatchMerging: Input L mismatch"
    C2, C4 = 2 * C, 4 * C
    assert w_reduction.shape == (C4, C2)
    if mxu_dtype is None:
        mxu_dtype = w_reduction.dtype

    # ---- zero-pad odd spatial sizes (the only slab copy in the whole pipeline) ----
    Hp, Wp = H + (H % 2), W + (W % 2)
    if (Hp, Wp) != (H, W):
        xs = jnp.pad(x.reshape(B, H, W, C),
                     ((0, 0), (0, Hp - H), (0, Wp - W), (0, 0)))
    else:
        xs = x
    R2, W2 = B * (Hp // 2), Wp // 2

    # Free view: (row-pairs, parity, tokens-per-row, [even-col C | odd-col C]).
    x4 = xs.reshape(R2, 2, W2, C2)

    # ---- fold the [x0,x1,x2,x3] channel permutation into the parameters ----
    # parity 0 carries channels [x0 | x2]; parity 1 carries [x1 | x3].
    def _split(p):
        return (jnp.concatenate([p[0:C], p[2 * C:3 * C]], axis=0),
                jnp.concatenate([p[C:2 * C], p[3 * C:4 * C]], axis=0))

    gt, gb = _split(ln_gamma)
    bt, bb = _split(ln_beta)
    gamma_tb = jnp.stack([gt, gb])                      # (2, 2C)
    beta_tb = jnp.stack([bt, bb])                       # (2, 2C)
    wt, wb = _split(w_reduction)                        # each (2C, 2C)
    wt = wt.astype(mxu_dtype)
    wb = wb.astype(mxu_dtype)

    # ---- VMEM-aware row-block selection (divisor of R2 => never pad the slab) ----
    in_isz = jnp.dtype(x.dtype).itemsize
    out_isz = in_isz
    w_isz = jnp.dtype(mxu_dtype).itemsize
    p_isz = jnp.dtype(gamma_tb.dtype).itemsize
    params_bytes = 2 * (2 * C2) * p_isz                 # gamma_tb + beta_tb
    weights_bytes = 2 * (C2 * C2) * w_isz               # wt + wb
    const_bytes = 2 * (params_bytes + weights_bytes)    # double-buffered residents
    # TODO(synk): for very large C (4C >= 3072) mark the resident weight/param specs
    # pipeline_mode=pl.Buffered(1) to drop their second buffer on v7x's 64 MiB VMEM.

    def step_bytes(tr):
        rows = tr * W2
        return (2 * tr * 2 * W2 * C2 * in_isz           # input block (double-buffered)
                + 2 * rows * C2 * out_isz                # output block (double-buffered)
                + 5 * rows * C2 * 4                      # f32 temporaries in the body
                + const_bytes)

    tr = _choose_row_block(R2, W2, step_bytes, target_rows=target_rows,
                           vmem_budget=vmem_budget_bytes)
    n_blocks = R2 // tr
    rows = tr * W2
    M = R2 * W2

    vmem_limit = int(min(64 * 1024 * 1024,
                         max(32 * 1024 * 1024, (step_bytes(tr) * 3) // 2)))

    kernel = functools.partial(_patch_merging_kernel, eps=eps, c4=float(C4))
    cost = pl.CostEstimate(
        flops=2 * M * C4 * C2 + 10 * M * C4,
        transcendentals=M,
        bytes_accessed=(M * C4 * in_isz + M * C2 * out_isz
                        + C4 * C2 * w_isz + 2 * C4 * p_isz),
    )

    out = pl.pallas_call(
        kernel,
        out_shape=jax.ShapeDtypeStruct((M, C2), x.dtype),
        grid_spec=pltpu.PrefetchScalarGridSpec(
            num_scalar_prefetch=0,
            grid=(n_blocks,),
            in_specs=[
                pl.BlockSpec((tr, 2, W2, C2), lambda i: (i, 0, 0, 0)),  # activations
                pl.BlockSpec((2, C2), lambda i: (0, 0)),                # LN gamma
                pl.BlockSpec((2, C2), lambda i: (0, 0)),                # LN beta
                pl.BlockSpec((C2, C2), lambda i: (0, 0)),               # W rows [x0|x2]
                pl.BlockSpec((C2, C2), lambda i: (0, 0)),               # W rows [x1|x3]
            ],
            out_specs=pl.BlockSpec((rows, C2), lambda i: (i, 0)),
        ),
        compiler_params=pltpu.CompilerParams(
            dimension_semantics=("parallel",),
            vmem_limit_bytes=vmem_limit),
        cost_estimate=cost,
    )(x4, gamma_tb, beta_tb, wt, wb)

    return out.reshape(B, (Hp // 2) * W2, C2)


def reference_patch_merging(x, ln_gamma, ln_beta, w_reduction, H, W, eps=1e-5):
    """Pure-JAX mirror of the PyTorch forward (materialized gather, two-pass LN)."""
    B, L, C = x.shape
    xs = x.reshape(B, H, W, C)
    Hp, Wp = H + (H % 2), W + (W % 2)
    if (Hp, Wp) != (H, W):
        xs = jnp.pad(xs, ((0, 0), (0, Hp - H), (0, Wp - W), (0, 0)))
    x0 = xs[:, 0::2, 0::2, :]
    x1 = xs[:, 1::2, 0::2, :]
    x2 = xs[:, 0::2, 1::2, :]
    x3 = xs[:, 1::2, 1::2, :]
    merged = jnp.concatenate([x0, x1, x2, x3], axis=-1).reshape(B, -1, 4 * C)
    mean = merged.mean(-1, keepdims=True)
    var = ((merged - mean) ** 2).mean(-1, keepdims=True)
    normed = (merged - mean) / jnp.sqrt(var + eps) * ln_gamma + ln_beta
    return normed @ w_reduction


if __name__ == "__main__":
    key = jax.random.PRNGKey(0)
    k_x, k_g, k_b, k_w, k_x2 = jax.random.split(key, 5)

    # Small-but-consistent shapes: B=2, C=64, H=W=16 -> 4C=256, 2C=128 (lane-dense).
    B, H, W, C = 2, 16, 16, 64
    x = jax.random.normal(k_x, (B, H * W, C), dtype=jnp.float32)
    ln_gamma = 1.0 + 0.1 * jax.random.normal(k_g, (4 * C,), dtype=jnp.float32)
    ln_beta = 0.1 * jax.random.normal(k_b, (4 * C,), dtype=jnp.float32)
    w_red = 0.05 * jax.random.normal(k_w, (4 * C, 2 * C), dtype=jnp.float32)

    ref = reference_patch_merging(x, ln_gamma, ln_beta, w_red, H, W)

    # f32-MXU path.  Tolerance is loose-ish because TPU default matmul precision
    # rounds f32 operands; the kernel's split matmul / single-pass LN decorrelate
    # ulp-level rounding from the XLA reference.  Real logic bugs would be O(0.1+).
    out_f32 = jax.block_until_ready(
        patch_merging(x, ln_gamma, ln_beta, w_red, H, W, mxu_dtype=jnp.float32))
    assert out_f32.shape == (B, (H // 2) * (W // 2), 2 * C)
    assert jnp.allclose(out_f32, ref, atol=1e-2, rtol=1e-2), "f32 path mismatch"

    # Default bf16-MXU path (f32 accumulation): looser tolerance vs f32 reference.
    out_bf16 = jax.block_until_ready(
        patch_merging(x, ln_gamma, ln_beta, w_red, H, W))
    assert out_bf16.shape == (B, (H // 2) * (W // 2), 2 * C)
    assert jnp.allclose(out_bf16, ref, atol=5e-2, rtol=5e-2), "bf16 path mismatch"

    # Odd spatial size exercises the zero-pad branch (H=15 -> padded to 16).
    Ho, Wo = 15, 16
    x_odd = jax.random.normal(k_x2, (B, Ho * Wo, C), dtype=jnp.float32)
    out_odd = jax.block_until_ready(
        patch_merging(x_odd, ln_gamma, ln_beta, w_red, Ho, Wo, mxu_dtype=jnp.float32))
    ref_odd = reference_patch_merging(x_odd, ln_gamma, ln_beta, w_red, Ho, Wo)
    assert out_odd.shape == (B, ((Ho + 1) // 2) * (Wo // 2), 2 * C)
    assert jnp.allclose(out_odd, ref_odd, atol=1e-2, rtol=1e-2), "odd-size mismatch"

    print("KERNEL_OK")
</pallas_src>

<mosaic_0001>
module attributes {stable_mosaic.version = 11 : i64} {
  func.func @_patch_merging_kernel(%arg0: i32, %arg1: memref<4x2x8x128xf32, #tpu.memory_space<vmem>>, %arg2: memref<2x128xf32, #tpu.memory_space<vmem>>, %arg3: memref<2x128xf32, #tpu.memory_space<vmem>>, %arg4: memref<128x128xf32, #tpu.memory_space<vmem>>, %arg5: memref<128x128xf32, #tpu.memory_space<vmem>>, %arg6: memref<32x128xf32, #tpu.memory_space<vmem>>) attributes {dimension_semantics = [#tpu.dimension_semantics<parallel>], iteration_bounds = array<i64: 4>, scalar_prefetch = 0 : i64, scratch_operands = 0 : i64, tpu.core_type = #tpu.core_type<tc>, window_params = [{transform_indices = @transform_0, window_bounds = array<i64: 4, 2, 8, 128>}, {pipeline_mode = #tpu.pipeline_mode<synchronous>, transform_indices = @transform_1, window_bounds = array<i64: 2, 128>}, {pipeline_mode = #tpu.pipeline_mode<synchronous>, transform_indices = @transform_2, window_bounds = array<i64: 2, 128>}, {pipeline_mode = #tpu.pipeline_mode<synchronous>, transform_indices = @transform_3, window_bounds = array<i64: 128, 128>}, {pipeline_mode = #tpu.pipeline_mode<synchronous>, transform_indices = @transform_4, window_bounds = array<i64: 128, 128>}, {transform_indices = @transform_5, window_bounds = array<i64: 32, 128>}]} {
    %c0 = arith.constant 0 : index
    %c0_0 = arith.constant 0 : index
    %c0_1 = arith.constant 0 : index
    %c0_2 = arith.constant 0 : index
    %0 = vector.load %arg1[%c0, %c0_0, %c0_1, %c0_2] : memref<4x2x8x128xf32, #tpu.memory_space<vmem>>, vector<4x2x8x128xf32>
    %1 = vector.extract_strided_slice %0 {offsets = [0, 0, 0, 0], sizes = [4, 1, 8, 128], strides = [1, 1, 1, 1]} : vector<4x2x8x128xf32> to vector<4x1x8x128xf32>
    %2 = vector.shape_cast %1 : vector<4x1x8x128xf32> to vector<4x8x128xf32>
    %3 = vector.shape_cast %2 : vector<4x8x128xf32> to vector<32x128xf32>
    %4 = vector.extract_strided_slice %0 {offsets = [0, 1, 0, 0], sizes = [4, 1, 8, 128], strides = [1, 1, 1, 1]} : vector<4x2x8x128xf32> to vector<4x1x8x128xf32>
    %5 = vector.shape_cast %4 : vector<4x1x8x128xf32> to vector<4x8x128xf32>
    %6 = vector.shape_cast %5 : vector<4x8x128xf32> to vector<32x128xf32>
    %7 = arith.addf %3, %6 : vector<32x128xf32>
    %cst = arith.constant dense<0.000000e+00> : vector<32xf32>
    %8 = vector.multi_reduction <add>, %7, %cst [1] : vector<32x128xf32> to vector<32xf32>
    %9 = vector.shape_cast %8 : vector<32xf32> to vector<32x1xf32>
    %cst_3 = arith.constant 3.906250e-03 : f32
    %10 = vector.broadcast %cst_3 : f32 to vector<32x1xf32>
    %11 = arith.mulf %9, %10 : vector<32x1xf32>
    %12 = arith.mulf %3, %3 : vector<32x128xf32>
    %13 = arith.mulf %6, %6 : vector<32x128xf32>
    %14 = arith.addf %12, %13 : vector<32x128xf32>
    %cst_4 = arith.constant dense<0.000000e+00> : vector<32xf32>
    %15 = vector.multi_reduction <add>, %14, %cst_4 [1] : vector<32x128xf32> to vector<32xf32>
    %16 = vector.shape_cast %15 : vector<32xf32> to vector<32x1xf32>
    %cst_5 = arith.constant 3.906250e-03 : f32
    %17 = vector.broadcast %cst_5 : f32 to vector<32x1xf32>
    %18 = arith.mulf %16, %17 : vector<32x1xf32>
    %19 = arith.mulf %11, %11 : vector<32x1xf32>
    %20 = arith.subf %18, %19 : vector<32x1xf32>
    %cst_6 = arith.constant 9.99999974E-6 : f32
    %21 = vector.broadcast %cst_6 : f32 to vector<32x1xf32>
    %22 = arith.addf %20, %21 : vector<32x1xf32>
    %23 = math.rsqrt %22 : vector<32x1xf32>
    %c0_7 = arith.constant 0 : index
    %c0_8 = arith.constant 0 : index
    %24 = vector.load %arg2[%c0_7, %c0_8] : memref<2x128xf32, #tpu.memory_space<vmem>>, vector<2x128xf32>
    %c0_9 = arith.constant 0 : index
    %c0_10 = arith.constant 0 : index
    %25 = vector.load %arg3[%c0_9, %c0_10] : memref<2x128xf32, #tpu.memory_space<vmem>>, vector<2x128xf32>
    %26 = vector.broadcast %11 : vector<32x1xf32> to vector<32x128xf32>
    %27 = arith.subf %3, %26 : vector<32x128xf32>
    %28 = vector.extract_strided_slice %24 {offsets = [0, 0], sizes = [1, 128], strides = [1, 1]} : vector<2x128xf32> to vector<1x128xf32>
    %29 = vector.shape_cast %28 : vector<1x128xf32> to vector<128xf32>
    %30 = vector.shape_cast %29 : vector<128xf32> to vector<1x128xf32>
    %31 = vector.broadcast %23 : vector<32x1xf32> to vector<32x128xf32>
    %32 = vector.broadcast %30 : vector<1x128xf32> to vector<32x128xf32>
    %33 = arith.mulf %31, %32 : vector<32x128xf32>
    %34 = arith.mulf %27, %33 : vector<32x128xf32>
    %35 = vector.extract_strided_slice %25 {offsets = [0, 0], sizes = [1, 128], strides = [1, 1]} : vector<2x128xf32> to vector<1x128xf32>
    %36 = vector.shape_cast %35 : vector<1x128xf32> to vector<128xf32>
    %37 = vector.shape_cast %36 : vector<128xf32> to vector<1x128xf32>
    %38 = vector.broadcast %37 : vector<1x128xf32> to vector<32x128xf32>
    %39 = arith.addf %34, %38 : vector<32x128xf32>
    %40 = vector.broadcast %11 : vector<32x1xf32> to vector<32x128xf32>
    %41 = arith.subf %6, %40 : vector<32x128xf32>
    %42 = vector.extract_strided_slice %24 {offsets = [1, 0], sizes = [1, 128], strides = [1, 1]} : vector<2x128xf32> to vector<1x128xf32>
    %43 = vector.shape_cast %42 : vector<1x128xf32> to vector<128xf32>
    %44 = vector.shape_cast %43 : vector<128xf32> to vector<1x128xf32>
    %45 = vector.broadcast %23 : vector<32x1xf32> to vector<32x128xf32>
    %46 = vector.broadcast %44 : vector<1x128xf32> to vector<32x128xf32>
    %47 = arith.mulf %45, %46 : vector<32x128xf32>
    %48 = arith.mulf %41, %47 : vector<32x128xf32>
    %49 = vector.extract_strided_slice %25 {offsets = [1, 0], sizes = [1, 128], strides = [1, 1]} : vector<2x128xf32> to vector<1x128xf32>
    %50 = vector.shape_cast %49 : vector<1x128xf32> to vector<128xf32>
    %51 = vector.shape_cast %50 : vector<128xf32> to vector<1x128xf32>
    %52 = vector.broadcast %51 : vector<1x128xf32> to vector<32x128xf32>
    %53 = arith.addf %48, %52 : vector<32x128xf32>
    %c0_11 = arith.constant 0 : index
    %c0_12 = arith.constant 0 : index
    %54 = vector.load %arg4[%c0_11, %c0_12] : memref<128x128xf32, #tpu.memory_space<vmem>>, vector<128x128xf32>
    %cst_13 = arith.constant dense<0.000000e+00> : vector<32x128xf32>
    %55 = tpu.matmul %39, %54, %cst_13 {dimension_numbers = #tpu.dot_dimension_numbers<[1], [0], [0], [1], [0, 0, 1, 1], [], []>} : vector<32x128xf32>, vector<128x128xf32>, vector<32x128xf32> -> vector<32x128xf32>
    %c0_14 = arith.constant 0 : index
    %c0_15 = arith.constant 0 : index
    %56 = vector.load %arg5[%c0_14, %c0_15] : memref<128x128xf32, #tpu.memory_space<vmem>>, vector<128x128xf32>
    %cst_16 = arith.constant dense<0.000000e+00> : vector<32x128xf32>
    %57 = tpu.matmul %53, %56, %cst_16 {dimension_numbers = #tpu.dot_dimension_numbers<[1], [0], [0], [1], [0, 0, 1, 1], [], []>} : vector<32x128xf32>, vector<128x128xf32>, vector<32x128xf32> -> vector<32x128xf32>
    %58 = arith.addf %55, %57 : vector<32x128xf32>
    %c0_17 = arith.constant 0 : index
    %c0_18 = arith.constant 0 : index
    %59 = vector.load %arg6[%c0_17, %c0_18] : memref<32x128xf32, #tpu.memory_space<vmem>>, vector<32x128xf32>
    tpu.vector_store %arg6[%c0_17, %c0_18], %58 {strides = array<i32>} : memref<32x128xf32, #tpu.memory_space<vmem>>, vector<32x128xf32>,
    return
  }
  func.func @transform_0(%arg0: i32) -> (i32, i32, i32, i32) {
    %c0_i32 = arith.constant 0 : i32
    %c0_i32_0 = arith.constant 0 : i32
    %c0_i32_1 = arith.constant 0 : i32
    %c0_i32_2 = arith.constant 0 : i32
    return %arg0, %c0_i32, %c0_i32_0, %c0_i32_1 : i32, i32, i32, i32
  }
  func.func @transform_1(%arg0: i32) -> (i32, i32) {
    %c0_i32 = arith.constant 0 : i32
    %c0_i32_0 = arith.constant 0 : i32
    %c0_i32_1 = arith.constant 0 : i32
    return %c0_i32, %c0_i32_0 : i32, i32
  }
  func.func @transform_2(%arg0: i32) -> (i32, i32) {
    %c0_i32 = arith.constant 0 : i32
    %c0_i32_0 = arith.constant 0 : i32
    %c0_i32_1 = arith.constant 0 : i32
    return %c0_i32, %c0_i32_0 : i32, i32
  }
  func.func @transform_3(%arg0: i32) -> (i32, i32) {
    %c0_i32 = arith.constant 0 : i32
    %c0_i32_0 = arith.constant 0 : i32
    %c0_i32_1 = arith.constant 0 : i32
    return %c0_i32, %c0_i32_0 : i32, i32
  }
  func.func @transform_4(%arg0: i32) -> (i32, i32) {
    %c0_i32 = arith.constant 0 : i32
    %c0_i32_0 = arith.constant 0 : i32
    %c0_i32_1 = arith.constant 0 : i32
    return %c0_i32, %c0_i32_0 : i32, i32
  }
  func.func @transform_5(%arg0: i32) -> (i32, i32) {
    %c0_i32 = arith.constant 0 : i32
    %c0_i32_0 = arith.constant 0 : i32
    return %arg0, %c0_i32 : i32, i32
  }
}

</mosaic_0001>

<llo_original>
// kernel: tpu_custom_call.1
$region0: #{tpu_custom_call.1}
  #allocation0 [shape = 'u32[]', space=smem, size = 0x4, offset = 0x4, fixed_abs, tag = 'smem constant byte address 0x4 - core index']
  #allocation1 [shape = 'u32[72,128]{1,0:T(1,128)}', space=vmem, size = 0x9000, scoped, tag = 'internal scratch']
  %s0 = inlined_call_operand.hbm [shape: f32[16,2,8,128], index: 0, kind: input, shape index: {}]
  %s1 = inlined_call_operand.hbm [shape: f32[2,128], index: 1, kind: input, shape index: {}]
  %s2 = inlined_call_operand.hbm [shape: f32[2,128], index: 2, kind: input, shape index: {}]
  %s3 = inlined_call_operand.hbm [shape: f32[128,128], index: 3, kind: input, shape index: {}]
  %s4 = inlined_call_operand.hbm [shape: f32[128,128], index: 4, kind: input, shape index: {}]
  %s5 = inlined_call_operand.hbm [shape: f32[128,128], index: 5, kind: output, shape index: {}]
  %s6 = sld [smem:[#allocation0]]
  $region73: #{tpu_custom_call.1} parent=0
    _
  %s8 = ssub.s32 1, %s6
  %s9 = scalar_select 0, %s8, %s6
  $region1: #{tpu_custom_call.1} parent=0
    #allocation2 [shape = 'u8[65536]{0}', space=vmem, size = 0x10000, scoped, tag = 'input window, operand 0']
    #allocation3 [shape = 's32[2]{0}', space=sflag, size = 0x8, scoped, tag = 'scoped memory for tpu_custom_call.1']
    #allocation4 [shape = 's32[2]{0}', space=sflag, size = 0x8, scoped, tag = 'scoped memory for tpu_custom_call.1']
    #allocation5 [shape = 'u8[1024]{0}', space=vmem, size = 0x400, scoped, tag = 'input window, operand 1, single buffered']
    #allocation6 [shape = 's32[1]{0}', space=sflag, size = 0x4, scoped, tag = 'scoped memory for tpu_custom_call.1']
    #allocation7 [shape = 'u8[1024]{0}', space=vmem, size = 0x400, scoped, tag = 'input window, operand 2, single buffered']
    #allocation8 [shape = 'u8[65536]{0}', space=vmem, size = 0x10000, scoped, tag = 'input window, operand 3, single buffered']
    #allocation9 [shape = 's32[1]{0}', space=sflag, size = 0x4, scoped, tag = 'scoped memory for tpu_custom_call.1']
    #allocation10 [shape = 'u8[65536]{0}', space=vmem, size = 0x10000, scoped, tag = 'input window, operand 4, single buffered']
    #allocation11 [shape = 'u8[32768]{0}', space=vmem, size = 0x8000, scoped, tag = 'output window, operand 0']
    %10 = vsyncpa [#allocation3], 0
    %s11 = scalar_lea.sflag [#allocation3], 1
    %12 = vsyncpa %s11, 0
    %13 = vsyncpa [#allocation6], 0
    %14 = vsyncpa [#allocation9], 0
    %15 = vsyncpa [#allocation4], 0
    %s16 = scalar_lea.sflag [#allocation4], 1
    %17 = vsyncpa %s16, 0
    loop: start=0, step=1, limit=6
    $region2: #{tpu_custom_call.1} parent=1 // loop_pre_header
      _
    $region3: #{tpu_custom_call.1} parent=1 // loop_header
      %s19 = sphi 0, %s23
      %p20 = scmp.ge.s32.totalorder %s19, 6
      %s29 = sphi 0, %s31
      %s32 = sphi 0, %s29
      %s33 = sphi 0, %s32
      %s49 = sphi 0, %s33
      %s53 = sphi 0, %s53
      %s55 = sphi 0, %s53
      %s56 = sphi 0, %s55
      %s70 = sphi 0, %s56
      %s74 = sphi 0, %s74
      %s76 = sphi 0, %s74
      %s77 = sphi 0, %s76
      %s91 = sphi 0, %s77
      %s95 = sphi 0, %s95
      %s97 = sphi 0, %s95
      %s98 = sphi 0, %s97
      %s112 = sphi 0, %s98
      %s116 = sphi 0, %s116
      %s118 = sphi 0, %s116
      %s119 = sphi 0, %s118
      %s133 = sphi 0, %s119
      %s139 = sphi 0, %s141
      %s142 = sphi 0, %s139
      %s143 = sphi 0, %s142
      %s159 = sphi 0, %s143
    $region4: #{tpu_custom_call.1} parent=1 // loop_header_branch
      %22 = sbr.rel (%p20) target = $region8
    $region5: #{tpu_custom_call.1} parent=1 // loop_body
      %s24 = ssub.s32 %s19, 1
      %s25 = ssub.s32 %s19, 2
      %s26 = sadd.s32 %s19, 1
      %s27 = ssub.s32 %s19, %s26
      %p28 = scmp.eq.s32.totalorder %s27, 0
      %s30 = sadd.s32 %s29, 1
      %s31 = scalar_select %p28, %s29, %s30
      %p34 = pneg %p28
      %p35 = scmp.eq.s32.totalorder %s19, 3
      %p36 = por %p34, %p35
      %p37 = scmp.ne.s32.totalorder %s29, %s32
      %p38 = scmp.eq.s32.totalorder %s19, 0
      %p39 = por %p37, %p38
      %p40 = scmp.ne.s32.totalorder %s29, %s32
      %p41 = scmp.eq.s32.totalorder %s24, 3
      %p42 = por %p40, %p41
      %p43 = scmp.ne.s32.totalorder %s32, %s33
      %p44 = scmp.eq.s32.totalorder %s24, 0
      %p45 = por %p43, %p44
      %p46 = scmp.ne.s32.totalorder %s32, %s33
      %p47 = scmp.eq.s32.totalorder %s25, 3
      %p48 = por %p46, %p47
      %p50 = scmp.ne.s32.totalorder %s33, %s49
      %p51 = scmp.eq.s32.totalorder %s25, 0
      %p52 = por %p50, %p51
      %s54 = sadd.s32 %s53, 1
      %p57 = scmp.eq.s32.totalorder %s19, 3
      %p58 = scmp.ne.s32.totalorder %s53, %s55
      %p59 = scmp.eq.s32.totalorder %s19, 0
      %p60 = por %p58, %p59
      %p61 = scmp.ne.s32.totalorder %s53, %s55
      %p62 = scmp.eq.s32.totalorder %s24, 3
      %p63 = por %p61, %p62
      %p64 = scmp.ne.s32.totalorder %s55, %s56
      %p65 = scmp.eq.s32.totalorder %s24, 0
      %p66 = por %p64, %p65
      %p67 = scmp.ne.s32.totalorder %s55, %s56
      %p68 = scmp.eq.s32.totalorder %s25, 3
      %p69 = por %p67, %p68
      %p71 = scmp.ne.s32.totalorder %s56, %s70
      %p72 = scmp.eq.s32.totalorder %s25, 0
      %p73 = por %p71, %p72
      %s75 = sadd.s32 %s74, 1
      %p78 = scmp.eq.s32.totalorder %s19, 3
      %p79 = scmp.ne.s32.totalorder %s74, %s76
      %p80 = scmp.eq.s32.totalorder %s19, 0
      %p81 = por %p79, %p80
      %p82 = scmp.ne.s32.totalorder %s74, %s76
      %p83 = scmp.eq.s32.totalorder %s24, 3
      %p84 = por %p82, %p83
      %p85 = scmp.ne.s32.totalorder %s76, %s77
      %p86 = scmp.eq.s32.totalorder %s24, 0
      %p87 = por %p85, %p86
      %p88 = scmp.ne.s32.totalorder %s76, %s77
      %p89 = scmp.eq.s32.totalorder %s25, 3
      %p90 = por %p88, %p89
      %p92 = scmp.ne.s32.totalorder %s77, %s91
      %p93 = scmp.eq.s32.totalorder %s25, 0
      %p94 = por %p92, %p93
      %s96 = sadd.s32 %s95, 1
      %p99 = scmp.eq.s32.totalorder %s19, 3
      %p100 = scmp.ne.s32.totalorder %s95, %s97
      %p101 = scmp.eq.s32.totalorder %s19, 0
      %p102 = por %p100, %p101
      %p103 = scmp.ne.s32.totalorder %s95, %s97
      %p104 = scmp.eq.s32.totalorder %s24, 3
      %p105 = por %p103, %p104
      %p106 = scmp.ne.s32.totalorder %s97, %s98
      %p107 = scmp.eq.s32.totalorder %s24, 0
      %p108 = por %p106, %p107
      %p109 = scmp.ne.s32.totalorder %s97, %s98
      %p110 = scmp.eq.s32.totalorder %s25, 3
      %p111 = por %p109, %p110
      %p113 = scmp.ne.s32.totalorder %s98, %s112
      %p114 = scmp.eq.s32.totalorder %s25, 0
      %p115 = por %p113, %p114
      %s117 = sadd.s32 %s116, 1
      %p120 = scmp.eq.s32.totalorder %s19, 3
      %p121 = scmp.ne.s32.totalorder %s116, %s118
      %p122 = scmp.eq.s32.totalorder %s19, 0
      %p123 = por %p121, %p122
      %p124 = scmp.ne.s32.totalorder %s116, %s118
      %p125 = scmp.eq.s32.totalorder %s24, 3
      %p126 = por %p124, %p125
      %p127 = scmp.ne.s32.totalorder %s118, %s119
      %p128 = scmp.eq.s32.totalorder %s24, 0
      %p129 = por %p127, %p128
      %p130 = scmp.ne.s32.totalorder %s118, %s119
      %p131 = scmp.eq.s32.totalorder %s25, 3
      %p132 = por %p130, %p131
      %p134 = scmp.ne.s32.totalorder %s119, %s133
      %p135 = scmp.eq.s32.totalorder %s25, 0
      %p136 = por %p134, %p135
      %s137 = ssub.s32 %s19, %s26
      %p138 = scmp.eq.s32.totalorder %s137, 0
      %s140 = sadd.s32 %s139, 1
      %s141 = scalar_select %p138, %s139, %s140
      %p144 = pneg %p138
      %p145 = scmp.eq.s32.totalorder %s19, 3
      %p146 = por %p144, %p145
      %p147 = scmp.ne.s32.totalorder %s139, %s142
      %p148 = scmp.eq.s32.totalorder %s19, 0
      %p149 = por %p147, %p148
      %p150 = scmp.ne.s32.totalorder %s139, %s142
      %p151 = scmp.eq.s32.totalorder %s24, 3
      %p152 = por %p150, %p151
      %p153 = scmp.ne.s32.totalorder %s142, %s143
      %p154 = scmp.eq.s32.totalorder %s24, 0
      %p155 = por %p153, %p154
      %p156 = scmp.ne.s32.totalorder %s142, %s143
      %p157 = scmp.eq.s32.totalorder %s25, 3
      %p158 = por %p156, %p157
      %p160 = scmp.ne.s32.totalorder %s143, %s159
      %p161 = scmp.eq.s32.totalorder %s25, 0
      %p162 = por %p160, %p161
      %p163 = scmp.le.s32.totalorder 1, %s19
      %p164 = scmp.lt.s32.totalorder %s19, 5
      %p165 = pnand %p163, %p164
      %p166 = pneg %p165
      // Predicated region
      $region9: #{tpu_custom_call.1} parent=5 // pred_check
        _
      $region10: #{tpu_custom_call.1} parent=5 // pred_check_branch
        %168 = sbr.rel (%p165) target = $region12
      $region11: #{tpu_custom_call.1} parent=5 // pred_region
        %s169 = ssub.s32 %s19, 1
        // Predicated region
        $region13: #{tpu_custom_call.1} parent=11 // pred_check
          %p170 = pneg %p66
        $region14: #{tpu_custom_call.1} parent=11 // pred_check_branch
          %172 = sbr.rel (%p170) target = $region16
        $region15: #{tpu_custom_call.1} parent=11 // pred_region
          %174 = vsyncadd [#allocation6], 0
          %s176 = sshll.u32 %s1, 4
          %s177 = int_to_ptr.hbm [resolvable:$true] %s176
          %s178 = sshll.u32 [#allocation5], 4
          %s179 = int_to_ptr.vmem [resolvable:$true] %s178
          %181 = dma.hbm_to_vmem [thread:$0]  %s177, 32, %s179, [#allocation6]
        $region16: #{tpu_custom_call.1} parent=11 // pred_fallthru
          _
        // Predicated region
        $region17: #{tpu_custom_call.1} parent=11 // pred_check
          %p182 = pneg %p87
        $region18: #{tpu_custom_call.1} parent=11 // pred_check_branch
          %184 = sbr.rel (%p182) target = $region20
        $region19: #{tpu_custom_call.1} parent=11 // pred_region
          %186 = vsyncadd [#allocation6], 0
          %s188 = sshll.u32 %s2, 4
          %s189 = int_to_ptr.hbm [resolvable:$true] %s188
          %s190 = sshll.u32 [#allocation7], 4
          %s191 = int_to_ptr.vmem [resolvable:$true] %s190
          %193 = dma.hbm_to_vmem [thread:$0]  %s189, 32, %s191, [#allocation6]
        $region20: #{tpu_custom_call.1} parent=11 // pred_fallthru
          _
        // Predicated region
        $region21: #{tpu_custom_call.1} parent=11 // pred_check
          %p194 = pneg %p108
        $region22: #{tpu_custom_call.1} parent=11 // pred_check_branch
          %196 = sbr.rel (%p194) target = $region24
        $region23: #{tpu_custom_call.1} parent=11 // pred_region
          %198 = vsyncadd [#allocation9], 0
          %s199 = sshll.u32 %s3, 4
          %s200 = int_to_ptr.hbm [resolvable:$true] %s199
          %s201 = sshll.u32 [#allocation8], 4
          %s202 = int_to_ptr.vmem [resolvable:$true] %s201
          %207 = dma.hbm_to_vmem [thread:$0]  %s200, 2048, %s202, [#allocation9], 128, 128, 8
        $region24: #{tpu_custom_call.1} parent=11 // pred_fallthru
          _
        // Predicated region
        $region25: #{tpu_custom_call.1} parent=11 // pred_check
          %p208 = pneg %p129
        $region26: #{tpu_custom_call.1} parent=11 // pred_check_branch
          %210 = sbr.rel (%p208) target = $region28
        $region27: #{tpu_custom_call.1} parent=11 // pred_region
          %212 = vsyncadd [#allocation9], 0
          %s213 = sshll.u32 %s4, 4
          %s214 = int_to_ptr.hbm [resolvable:$true] %s213
          %s215 = sshll.u32 [#allocation10], 4
          %s216 = int_to_ptr.vmem [resolvable:$true] %s215
          %221 = dma.hbm_to_vmem [thread:$0]  %s214, 2048, %s216, [#allocation9], 128, 128, 8
        $region28: #{tpu_custom_call.1} parent=11 // pred_fallthru
          _
      $region12: #{tpu_custom_call.1} parent=5 // pred_fallthru
        _
      %p222 = scmp.lt.s32.totalorder %s19, 4
      // Predicated region
      $region29: #{tpu_custom_call.1} parent=5 // pred_check
        %p223 = pneg %p222
      $region30: #{tpu_custom_call.1} parent=5 // pred_check_branch
        %225 = sbr.rel (%p223) target = $region32
      $region31: #{tpu_custom_call.1} parent=5 // pred_region
        // Predicated region
        $region33: #{tpu_custom_call.1} parent=31 // pred_check
          %p226 = pneg %p39
        $region34: #{tpu_custom_call.1} parent=31 // pred_check_branch
          %228 = sbr.rel (%p226) target = $region36
        $region35: #{tpu_custom_call.1} parent=31 // pred_region
          %s229 = sand.u32 %s29, 1
          %s230 = scalar_lea.sflag [#allocation3], %s229
          %s231 = sand.u32 %s29, 1
          %s232 = smul.addr %s231, 64
          %s233 = scalar_lea.vmem [#allocation2], %s232
          %s234 = smul.u32 4, %s19
          %236 = vsyncadd %s230, 0
          %s237 = smul.addr %s234, 2
          %s238 = smul.addr %s237, 8
          %s239 = scalar_lea.hbm %s0, %s238
          %s240 = sshll.u32 %s239, 4
          %s241 = int_to_ptr.hbm [resolvable:$true] %s240
          %s242 = sshll.u32 %s233, 4
          %s243 = int_to_ptr.vmem [resolvable:$true] %s242
          %248 = dma.hbm_to_vmem [thread:$0]  %s241, 1024, %s243, %s230, 128, 128, 8
        $region36: #{tpu_custom_call.1} parent=31 // pred_fallthru
          _
      $region32: #{tpu_custom_call.1} parent=5 // pred_fallthru
        _
      %p249 = scmp.le.s32.totalorder 1, %s19
      %p250 = scmp.lt.s32.totalorder %s19, 5
      %p251 = pnand %p249, %p250
      %p252 = pneg %p251
      // Predicated region
      $region37: #{tpu_custom_call.1} parent=5 // pred_check
        _
      $region38: #{tpu_custom_call.1} parent=5 // pred_check_branch
        %254 = sbr.rel (%p251) target = $region40
      $region39: #{tpu_custom_call.1} parent=5 // pred_region
        %s255 = ssub.s32 %s19, 1
        %s256 = sand.u32 %s32, 1
        %s257 = scalar_lea.sflag [#allocation3], %s256
        %s258 = sand.u32 %s32, 1
        %s259 = smul.addr %s258, 64
        %s260 = scalar_lea.vmem [#allocation2], %s259
        // Predicated region
        $region41: #{tpu_custom_call.1} parent=39 // pred_check
          %p261 = pneg %p45
        $region42: #{tpu_custom_call.1} parent=39 // pred_check_branch
          %263 = sbr.rel (%p261) target = $region44
        $region43: #{tpu_custom_call.1} parent=39 // pred_region
          %265 = dma.done %s257, 1024
        $region44: #{tpu_custom_call.1} parent=39 // pred_fallthru
          _
        // Predicated region
        $region45: #{tpu_custom_call.1} parent=39 // pred_check
          %p266 = pneg %p66
        $region46: #{tpu_custom_call.1} parent=39 // pred_check_branch
          %268 = sbr.rel (%p266) target = $region48
        $region47: #{tpu_custom_call.1} parent=39 // pred_region
          %270 = dma.done [#allocation6], 32
        $region48: #{tpu_custom_call.1} parent=39 // pred_fallthru
          _
        // Predicated region
        $region49: #{tpu_custom_call.1} parent=39 // pred_check
          %p271 = pneg %p87
        $region50: #{tpu_custom_call.1} parent=39 // pred_check_branch
          %273 = sbr.rel (%p271) target = $region52
        $region51: #{tpu_custom_call.1} parent=39 // pred_region
          %275 = dma.done [#allocation6], 32
        $region52: #{tpu_custom_call.1} parent=39 // pred_fallthru
          _
        // Predicated region
        $region53: #{tpu_custom_call.1} parent=39 // pred_check
          %p276 = pneg %p108
        $region54: #{tpu_custom_call.1} parent=39 // pred_check_branch
          %278 = sbr.rel (%p276) target = $region56
        $region55: #{tpu_custom_call.1} parent=39 // pred_region
          %280 = dma.done [#allocation9], 2048
        $region56: #{tpu_custom_call.1} parent=39 // pred_fallthru
          _
        // Predicated region
        $region57: #{tpu_custom_call.1} parent=39 // pred_check
          %p281 = pneg %p129
        $region58: #{tpu_custom_call.1} parent=39 // pred_check_branch
          %283 = sbr.rel (%p281) target = $region60
        $region59: #{tpu_custom_call.1} parent=39 // pred_region
          %285 = dma.done [#allocation9], 2048
        $region60: #{tpu_custom_call.1} parent=39 // pred_fallthru
          _
        %s286 = sand.u32 %s32, 1
        %s287 = scalar_lea.sflag [#allocation3], %s286
        %s288 = sand.u32 %s32, 1
        %s289 = smul.addr %s288, 64
        %s290 = scalar_lea.vmem [#allocation2], %s289
        %p291 = pneg %p45
        %p292 = pneg %p42
        %p293 = pneg %p66
        %p294 = pneg %p63
        %p295 = pneg %p87
        %p296 = pneg %p84
        %p297 = pneg %p108
        %p298 = pneg %p105
        %p299 = pneg %p129
        %p300 = pneg %p126
        %p301 = pneg %p155
        %p302 = pneg %p152
        %s303 = sand.u32 %s142, 1
        %s304 = scalar_lea.sflag [#allocation4], %s303
        %s305 = sand.u32 %s142, 1
        %s306 = smul.addr %s305, 32
        %s307 = scalar_lea.vmem [#allocation11], %s306
        %s308 = smul.u32 4, %s24
        %s309 = smul.u32 4, %s24
        %v310 = vld [vmem:[%s260] sm:$0xff]
        %v311 = vld [vmem:[%s260 + $0x8] sm:$0xff]
        %v312 = vld [vmem:[%s260 + $0x10] sm:$0xff]
        %v313 = vld [vmem:[%s260 + $0x18] sm:$0xff]
        %v314 = vld [vmem:[%s260 + $0x20] sm:$0xff]
        %v315 = vld [vmem:[%s260 + $0x28] sm:$0xff]
        %v316 = vld [vmem:[%s260 + $0x30] sm:$0xff]
        %v317 = vld [vmem:[%s260 + $0x38] sm:$0xff]
        %v318 = vadd.f32 %v310, %v311
        %v319 = vadd.f32 %v312, %v313
        %v320 = vadd.f32 %v314, %v315
        %v321 = vadd.f32 %v316, %v317
        %322 = vadd.xlane.f32.xlu0 %v318
        %v323 = vpop.xlane.xlu0 %322
        %324 = vadd.xlane.f32.xlu0 %v319
        %v325 = vpop.xlane.xlu0 %324
        %326 = vadd.xlane.f32.xlu0 %v320
        %v327 = vpop.xlane.xlu0 %326
        %328 = vadd.xlane.f32.xlu0 %v321
        %v329 = vpop.xlane.xlu0 %328
        %v330 = vmul.f32 %v323, 0.00390625
        %v331 = vmul.f32 %v325, 0.00390625
        %v332 = vmul.f32 %v327, 0.00390625
        %v333 = vmul.f32 %v329, 0.00390625
        %v334 = vmul.f32 %v310, %v310
        %v335 = vmul.f32 %v312, %v312
        %v336 = vmul.f32 %v314, %v314
        %v337 = vmul.f32 %v316, %v316
        %v338 = vmul.f32 %v311, %v311
        %v339 = vmul.f32 %v313, %v313
        %v340 = vmul.f32 %v315, %v315
        %v341 = vmul.f32 %v317, %v317
        %v342 = vadd.f32 %v334, %v338
        %v343 = vadd.f32 %v335, %v339
        %v344 = vadd.f32 %v336, %v340
        %v345 = vadd.f32 %v337, %v341
        %346 = vadd.xlane.f32.xlu0 %v342
        %v347 = vpop.xlane.xlu0 %346
        %348 = vadd.xlane.f32.xlu0 %v343
        %v349 = vpop.xlane.xlu0 %348
        %350 = vadd.xlane.f32.xlu0 %v344
        %v351 = vpop.xlane.xlu0 %350
        %352 = vadd.xlane.f32.xlu0 %v345
        %v353 = vpop.xlane.xlu0 %352
        %v354 = vmul.f32 %v347, 0.00390625
        %v355 = vmul.f32 %v349, 0.00390625
        %v356 = vmul.f32 %v351, 0.00390625
        %v357 = vmul.f32 %v353, 0.00390625
        %v358 = vmul.f32 %v330, %v330
        %v359 = vmul.f32 %v331, %v331
        %v360 = vmul.f32 %v332, %v332
        %v361 = vmul.f32 %v333, %v333
        %v362 = vsub.f32 %v354, %v358
        %v363 = vsub.f32 %v355, %v359
        %v364 = vsub.f32 %v356, %v360
        %v365 = vsub.f32 %v357, %v361
        %v366 = vadd.f32 %v362, 1e-05
        %v367 = vadd.f32 %v363, 1e-05
        %v368 = vadd.f32 %v364, 1e-05
        %v369 = vadd.f32 %v365, 1e-05
        %v370 = vrsqrt.pop %v366
        %v371 = vmul.f32 %v370, %v366
        %v372 = vmul.f32 %v371, %v370
        %v373 = vmul.f32 0.5, %v372
        %v374 = vsub.f32 1.5, %v373
        %v375 = vmul.f32 %v370, %v374
        %vm376 = vweird.f32 %v366
        %vm377 = vweird.f32 %v370
        %vm378 = vmor %vm376, %vm377
        %v379 = vsel %vm378, %v370, %v375
        %v380 = vrsqrt.pop %v367
        %v381 = vmul.f32 %v380, %v367
        %v382 = vmul.f32 %v381, %v380
        %v383 = vmul.f32 0.5, %v382
        %v384 = vsub.f32 1.5, %v383
        %v385 = vmul.f32 %v380, %v384
        %vm386 = vweird.f32 %v367
        %vm387 = vweird.f32 %v380
        %vm388 = vmor %vm386, %vm387
        %v389 = vsel %vm388, %v380, %v385
        %v390 = vrsqrt.pop %v368
        %v391 = vmul.f32 %v390, %v368
        %v392 = vmul.f32 %v391, %v390
        %v393 = vmul.f32 0.5, %v392
        %v394 = vsub.f32 1.5, %v393
        %v395 = vmul.f32 %v390, %v394
        %vm396 = vweird.f32 %v368
        %vm397 = vweird.f32 %v390
        %vm398 = vmor %vm396, %vm397
        %v399 = vsel %vm398, %v390, %v395
        %v400 = vrsqrt.pop %v369
        %v401 = vmul.f32 %v400, %v369
        %v402 = vmul.f32 %v401, %v400
        %v403 = vmul.f32 0.5, %v402
        %v404 = vsub.f32 1.5, %v403
        %v405 = vmul.f32 %v400, %v404
        %vm406 = vweird.f32 %v369
        %vm407 = vweird.f32 %v400
        %vm408 = vmor %vm406, %vm407
        %v409 = vsel %vm408, %v400, %v405
        %v410 = vld [vmem:[#allocation5] sm:$0x3]
        %v411 = vld [vmem:[#allocation7] sm:$0x3]
        %v412 = vsub.f32 %v310, %v330
        %v413 = vsub.f32 %v312, %v331
        %v414 = vsub.f32 %v314, %v332
        %v415 = vsub.f32 %v316, %v333
        %v416 = vperm.slane %v410, 0
        %v417 = vmul.f32 %v379, %v416
        %v418 = vmul.f32 %v389, %v416
        %v419 = vmul.f32 %v399, %v416
        %v420 = vmul.f32 %v409, %v416
        %v421 = vmul.f32 %v412, %v417
        %v422 = vmul.f32 %v413, %v418
        %v423 = vmul.f32 %v414, %v419
        %v424 = vmul.f32 %v415, %v420
        %v425 = vperm.slane %v411, 0
        %v426 = vadd.f32 %v421, %v425
        %v427 = vadd.f32 %v422, %v425
        %v428 = vadd.f32 %v423, %v425
        %v429 = vadd.f32 %v424, %v425
        %v430 = vsub.f32 %v311, %v330
        %v431 = vsub.f32 %v313, %v331
        %v432 = vsub.f32 %v315, %v332
        %v433 = vsub.f32 %v317, %v333
        %v434 = vperm.slane %v410, 1
        %v435 = vmul.f32 %v379, %v434
        %v436 = vmul.f32 %v389, %v434
        %v437 = vmul.f32 %v399, %v434
        %v438 = vmul.f32 %v409, %v434
        %v439 = vmul.f32 %v430, %v435
        %v440 = vmul.f32 %v431, %v436
        %v441 = vmul.f32 %v432, %v437
        %v442 = vmul.f32 %v433, %v438
        %v443 = vperm.slane %v411, 1
        %v444 = vadd.f32 %v439, %v443
        %v445 = vadd.f32 %v440, %v443
        %v446 = vadd.f32 %v441, %v443
        %v447 = vadd.f32 %v442, %v443
        %v448 = vld [vmem:[#allocation8] sm:$0xff]
        %v449 = vld [vmem:[#allocation8 + $0x8] sm:$0xff]
        %v450 = vld [vmem:[#allocation8 + $0x10] sm:$0xff]
        %v451 = vld [vmem:[#allocation8 + $0x18] sm:$0xff]
        %v452 = vld [vmem:[#allocation8 + $0x20] sm:$0xff]
        %v453 = vld [vmem:[#allocation8 + $0x28] sm:$0xff]
        %v454 = vld [vmem:[#allocation8 + $0x30] sm:$0xff]
        %v455 = vld [vmem:[#allocation8 + $0x38] sm:$0xff]
        %v456 = vld [vmem:[#allocation8 + $0x40] sm:$0xff]
        %v457 = vld [vmem:[#allocation8 + $0x48] sm:$0xff]
        %v458 = vld [vmem:[#allocation8 + $0x50] sm:$0xff]
        %v459 = vld [vmem:[#allocation8 + $0x58] sm:$0xff]
        %v460 = vld [vmem:[#allocation8 + $0x60] sm:$0xff]
        %v461 = vld [vmem:[#allocation8 + $0x68] sm:$0xff]
        %v462 = vld [vmem:[#allocation8 + $0x70] sm:$0xff]
        %v463 = vld [vmem:[#allocation8 + $0x78] sm:$0xff]
        %v464 = vld [vmem:[#allocation10] sm:$0xff]
        %v465 = vld [vmem:[#allocation10 + $0x8] sm:$0xff]
        %v466 = vld [vmem:[#allocation10 + $0x10] sm:$0xff]
        %v467 = vld [vmem:[#allocation10 + $0x18] sm:$0xff]
        %v468 = vld [vmem:[#allocation10 + $0x20] sm:$0xff]
        %v469 = vld [vmem:[#allocation10 + $0x28] sm:$0xff]
        %v470 = vld [vmem:[#allocation10 + $0x30] sm:$0xff]
        %v471 = vld [vmem:[#allocation10 + $0x38] sm:$0xff]
        %v472 = vld [vmem:[#allocation10 + $0x40] sm:$0xff]
        %v473 = vld [vmem:[#allocation10 + $0x48] sm:$0xff]
        %v474 = vld [vmem:[#allocation10 + $0x50] sm:$0xff]
        %v475 = vld [vmem:[#allocation10 + $0x58] sm:$0xff]
        %v476 = vld [vmem:[#allocation10 + $0x60] sm:$0xff]
        %v477 = vld [vmem:[#allocation10 + $0x68] sm:$0xff]
        %v478 = vld [vmem:[#allocation10 + $0x70] sm:$0xff]
        %v479 = vld [vmem:[#allocation10 + $0x78] sm:$0xff]
        %480 = vmatpush.msra.mxu0 %v479
        %481 = vmatpush.msra.mxu0 %v478
        %482 = vmatpush.msra.mxu0 %v477
        %483 = vmatpush.msra.mxu0 %v476
        %484 = vmatpush.msra.mxu0 %v475
        %485 = vmatpush.msra.mxu0 %v474
        %486 = vmatpush.msra.mxu0 %v473
        %487 = vmatpush.msra.mxu0 %v472
        %488 = vmatpush.msra.mxu0 %v471
        %489 = vmatpush.msra.mxu0 %v470
        %490 = vmatpush.msra.mxu0 %v469
        %491 = vmatpush.msra.mxu0 %v468
        %492 = vmatpush.msra.mxu0 %v467
        %493 = vmatpush.msra.mxu0 %v466
        %494 = vmatpush.msra.mxu0 %v465
        %495 = vmatpush.msra.mxu0 %v464
        %496 = vmatmul.f32.gmra.mxu0 %v444
        %v497 = vpop.f32.mrf.mxu0
        %v498 = vadd.f32 0.0, %v497
        %499 = vmatmul.f32.gmra.mxu0 %v445
        %v500 = vpop.f32.mrf.mxu0
        %v501 = vadd.f32 0.0, %v500
        %502 = vmatmul.f32.gmra.mxu0 %v446
        %v503 = vpop.f32.mrf.mxu0
        %v504 = vadd.f32 0.0, %v503
        %505 = vmatmul.f32.gmra.mxu0 %v447
        %v506 = vpop.f32.mrf.mxu0
        %v507 = vadd.f32 0.0, %v506
        %508 = vdwg.mxu0
        %509 = vmatpush.msra.mxu0 %v463
        %510 = vmatpush.msra.mxu0 %v462
        %511 = vmatpush.msra.mxu0 %v461
        %512 = vmatpush.msra.mxu0 %v460
        %513 = vmatpush.msra.mxu0 %v459
        %514 = vmatpush.msra.mxu0 %v458
        %515 = vmatpush.msra.mxu0 %v457
        %516 = vmatpush.msra.mxu0 %v456
        %517 = vmatpush.msra.mxu0 %v455
        %518 = vmatpush.msra.mxu0 %v454
        %519 = vmatpush.msra.mxu0 %v453
        %520 = vmatpush.msra.mxu0 %v452
        %521 = vmatpush.msra.mxu0 %v451
        %522 = vmatpush.msra.mxu0 %v450
        %523 = vmatpush.msra.mxu0 %v449
        %524 = vmatpush.msra.mxu0 %v448
        %525 = vmatmul.f32.gmra.mxu0 %v426
        %v526 = vpop.f32.mrf.mxu0
        %v527 = vadd.f32 %v498, %v526
        %528 = vmatmul.f32.gmra.mxu0 %v427
        %v529 = vpop.f32.mrf.mxu0
        %v530 = vadd.f32 %v501, %v529
        %531 = vmatmul.f32.gmra.mxu0 %v428
        %v532 = vpop.f32.mrf.mxu0
        %v533 = vadd.f32 %v504, %v532
        %534 = vmatmul.f32.gmra.mxu0 %v429
        %v535 = vpop.f32.mrf.mxu0
        %v536 = vadd.f32 %v507, %v535
        %537 = vdwg.mxu0
        %538 = vst [vmem:[%s307] sm:$0xff] %v527
        %539 = vst [vmem:[%s307 + $0x8] sm:$0xff] %v530
        %540 = vst [vmem:[%s307 + $0x10] sm:$0xff] %v533
        %541 = vst [vmem:[%s307 + $0x18] sm:$0xff] %v536
        %s542 = sand.u32 %s142, 1
        %s543 = scalar_lea.sflag [#allocation4], %s542
        %s544 = sand.u32 %s142, 1
        %s545 = smul.addr %s544, 32
        %s546 = scalar_lea.vmem [#allocation11], %s545
        // Predicated region
        $region61: #{tpu_custom_call.1} parent=39 // pred_check
          %p547 = pneg %p152
        $region62: #{tpu_custom_call.1} parent=39 // pred_check_branch
          %549 = sbr.rel (%p547) target = $region64
        $region63: #{tpu_custom_call.1} parent=39 // pred_region
          %s550 = smul.u32 4, %s24
          %552 = vsyncadd %s543, 0
          %s553 = smul.addr %s550, 8
          %s554 = scalar_lea.hbm %s5, %s553
          %s555 = sshll.u32 %s546, 4
          %s556 = int_to_ptr.vmem [resolvable:$true] %s555
          %s557 = sshll.u32 %s554, 4
          %s558 = int_to_ptr.hbm [resolvable:$true] %s557
          %563 = dma.vmem_to_hbm [thread:$0]  %s556, 512, %s558, %s543, 128, 128, 8
        $region64: #{tpu_custom_call.1} parent=39 // pred_fallthru
          _
      $region40: #{tpu_custom_call.1} parent=5 // pred_fallthru
        _
      %p564 = scmp.le.s32.totalorder 2, %s19
      // Predicated region
      $region65: #{tpu_custom_call.1} parent=5 // pred_check
        %p565 = pneg %p564
      $region66: #{tpu_custom_call.1} parent=5 // pred_check_branch
        %567 = sbr.rel (%p565) target = $region68
      $region67: #{tpu_custom_call.1} parent=5 // pred_region
        %s568 = ssub.s32 %s19, 2
        // Predicated region
        $region69: #{tpu_custom_call.1} parent=67 // pred_check
          %p569 = pneg %p158
        $region70: #{tpu_custom_call.1} parent=67 // pred_check_branch
          %571 = sbr.rel (%p569) target = $region72
        $region71: #{tpu_custom_call.1} parent=67 // pred_region
          %s572 = sand.u32 %s143, 1
          %s573 = scalar_lea.sflag [#allocation4], %s572
          %s574 = sand.u32 %s143, 1
          %s575 = smul.addr %s574, 32
          %s576 = scalar_lea.vmem [#allocation11], %s575
          %578 = dma.done %s573, 512
        $region72: #{tpu_custom_call.1} parent=67 // pred_fallthru
          _
      $region68: #{tpu_custom_call.1} parent=5 // pred_fallthru
        _
    $region6: #{tpu_custom_call.1} parent=1 // loop_footer
      %s23 = sadd.s32 1, %s19
    $region7: #{tpu_custom_call.1} parent=1 // loop_footer_branch
      %18 = sbr.rel target = $region3
    $region8: #{tpu_custom_call.1} parent=1 // loop_exit
      _
    %579 = vsyncpa [#allocation3], 1
    %s580 = scalar_lea.sflag [#allocation3], 1
    %581 = vsyncpa %s580, 1
    %582 = vsyncpa [#allocation6], 1
    %583 = vsyncpa [#allocation9], 1
    %584 = vsyncpa [#allocation4], 1
    %s585 = scalar_lea.sflag [#allocation4], 1
    %586 = vsyncpa %s585, 1

</llo_original>
